<compile_context>
chip_gen: v7x
topology: tpu7x:2x2x1
jax: 0.10.0
libtpu: 0.0.40
codegen_flags: <defaults>
</compile_context>

<pallas_src>
import jax
import jax.numpy as jnp
from jax.experimental import pallas as pl
from jax.experimental.pallas import tpu as pltpu

# Izhikevich parameters (module defaults)
A = 0.02
B = 0.2
C = -65.0
D = 8.0
DT = 1.0
V_THRESH = 30.0

_COLS = 1024            # lane-dense last dim (8 * 128)
_MAX_BLOCK_ROWS = 256   # (256, 1024) f32 block = 1 MiB per array per buffer


# ---------------------------------------------------------------------------
# shared elementwise update (used by both kernels and kept identical to the
# pure-JAX reference so hardware / interpret results agree bit-for-bit up to
# rounding)
# ---------------------------------------------------------------------------
def _izh_update(v, u, inp):
    dv = 0.04 * (v * v) + 5.0 * v + 140.0 - u + inp
    du = A * (B * v - u)
    v_new = v + dv * DT
    u_new = u + du * DT
    fired = v_new >= V_THRESH
    v_out = jnp.where(fired, jnp.float32(C), v_new)
    u_out = jnp.where(fired, u_new + jnp.float32(D), u_new)
    return fired, v_out, u_out


# ---------------------------------------------------------------------------
# kernels
# ---------------------------------------------------------------------------
def _izh_step_kernel(v_ref, u_ref, i_ref, spk_ref, v_out_ref, u_out_ref):
    fired, v_out, u_out = _izh_update(v_ref[...], u_ref[...], i_ref[...])
    spk_ref[...] = fired.astype(spk_ref.dtype)
    v_out_ref[...] = v_out
    u_out_ref[...] = u_out


def _izh_multi_kernel(v_ref, u_ref, i_ref, spk_ref, v_out_ref, u_out_ref,
                      v_sc, u_sc):
    t = pl.program_id(1)

    @pl.when(t == 0)
    def _load_state():
        v_sc[...] = v_ref[...]
        u_sc[...] = u_ref[...]

    fired, v_out, u_out = _izh_update(v_sc[...], u_sc[...], i_ref[...])
    spk_ref[...] = fired.astype(spk_ref.dtype)
    v_sc[...] = v_out
    u_sc[...] = u_out

    @pl.when(t == pl.num_programs(1) - 1)
    def _store_state():
        v_out_ref[...] = v_sc[...]
        u_out_ref[...] = u_sc[...]


# ---------------------------------------------------------------------------
# layout helpers (elementwise op -> reshape is free layout plumbing)
# ---------------------------------------------------------------------------
def _plan_layout(total):
    rows = pl.cdiv(total, _COLS)
    if rows <= _MAX_BLOCK_ROWS:
        block_rows = rows                      # single block along rows
    else:
        block_rows = _MAX_BLOCK_ROWS
        rows = pl.cdiv(rows, block_rows) * block_rows
    return rows, block_rows


def _to_tiles(x, rows, total):
    x = jnp.asarray(x, jnp.float32).reshape(-1)
    padded = rows * _COLS
    if padded != total:
        x = jnp.pad(x, (0, padded - total))
    return x.reshape(rows, _COLS)


def _from_tiles(x, shape, total):
    return x.reshape(-1)[:total].reshape(shape)


_COMPILER_PARAMS_1D = pltpu.CompilerParams(
    dimension_semantics=("parallel",),
    vmem_limit_bytes=32 * 1024 * 1024,   # plenty for 12 MiB of buffers,
)                                        # leaves headroom on v7x's 64 MiB


_COMPILER_PARAMS_2D = pltpu.CompilerParams(
    dimension_semantics=("parallel", "arbitrary"),
    vmem_limit_bytes=32 * 1024 * 1024,
)


# ---------------------------------------------------------------------------
# single forward step: (v, u, I) -> (spikes, v', u')
# ---------------------------------------------------------------------------
def izhikevich_step(v, u, input_current, *, spike_dtype=jnp.float32):
    shape = v.shape
    total = v.size
    input_current = jnp.asarray(input_current).reshape(shape)  # .view(shape)
    rows, block_rows = _plan_layout(total)

    v2 = _to_tiles(v, rows, total)
    u2 = _to_tiles(u, rows, total)
    i2 = _to_tiles(input_current, rows, total)

    spec = pl.BlockSpec((block_rows, _COLS), lambda i: (i, 0))
    f32_out = jax.ShapeDtypeStruct((rows, _COLS), jnp.float32)
    spk_out = jax.ShapeDtypeStruct((rows, _COLS), spike_dtype)

    spikes, v_new, u_new = pl.pallas_call(
        _izh_step_kernel,
        grid=(rows // block_rows,),
        in_specs=[spec, spec, spec],
        out_specs=(spec, spec, spec),
        out_shape=(spk_out, f32_out, f32_out),
        input_output_aliases={0: 1, 1: 2},   # v -> v', u -> u' (in-place state)
        compiler_params=_COMPILER_PARAMS_1D,
    )(v2, u2, i2)

    return (_from_tiles(spikes, shape, total),
            _from_tiles(v_new, shape, total),
            _from_tiles(u_new, shape, total))


# ---------------------------------------------------------------------------
# fused T-timestep simulation: v/u stay VMEM-resident across the time axis
# ---------------------------------------------------------------------------
def izhikevich_multi_step(v, u, input_currents, *, spike_dtype=jnp.float32):
    T = input_currents.shape[0]
    shape = v.shape
    total = v.size
    rows, block_rows = _plan_layout(total)

    v2 = _to_tiles(v, rows, total)
    u2 = _to_tiles(u, rows, total)

    i_flat = jnp.asarray(input_currents, jnp.float32).reshape(T, -1)
    padded = rows * _COLS
    if padded != total:
        i_flat = jnp.pad(i_flat, ((0, 0), (0, padded - total)))
    i3 = i_flat.reshape(T, rows, _COLS)

    state_spec = pl.BlockSpec((block_rows, _COLS), lambda i, t: (i, 0))
    seq_spec = pl.BlockSpec((None, block_rows, _COLS), lambda i, t: (t, i, 0))

    spikes, v_new, u_new = pl.pallas_call(
        _izh_multi_kernel,
        grid=(rows // block_rows, T),
        in_specs=[state_spec, state_spec, seq_spec],
        out_specs=(seq_spec, state_spec, state_spec),
        out_shape=(jax.ShapeDtypeStruct((T, rows, _COLS), spike_dtype),
                   jax.ShapeDtypeStruct((rows, _COLS), jnp.float32),
                   jax.ShapeDtypeStruct((rows, _COLS), jnp.float32)),
        scratch_shapes=[pltpu.VMEM((block_rows, _COLS), jnp.float32),
                        pltpu.VMEM((block_rows, _COLS), jnp.float32)],
        input_output_aliases={0: 1, 1: 2},
        compiler_params=_COMPILER_PARAMS_2D,
    )(v2, u2, i3)

    spikes = spikes.reshape(T, -1)[:, :total].reshape((T,) + shape)
    return (spikes,
            _from_tiles(v_new, shape, total),
            _from_tiles(u_new, shape, total))


# ---------------------------------------------------------------------------
# pure-JAX reference (identical op ordering to the kernel)
# ---------------------------------------------------------------------------
def izhikevich_ref(v, u, inp):
    dv = 0.04 * (v * v) + 5.0 * v + 140.0 - u + inp
    du = A * (B * v - u)
    v_new = v + dv * DT
    u_new = u + du * DT
    fired = v_new >= V_THRESH
    spikes = fired.astype(jnp.float32)
    v_out = jnp.where(fired, jnp.float32(C), v_new)
    u_out = jnp.where(fired, u_new + jnp.float32(D), u_new)
    # elements whose spike decision is numerically borderline: tiny rounding
    # differences between the kernel and this reference may legitimately flip
    # them, so the test masks them out.
    borderline = jnp.abs(v_new - V_THRESH) < 1e-3
    return spikes, v_out, u_out, borderline


if __name__ == "__main__":
    key = jax.random.PRNGKey(0)
    k1, k2, k3, k4 = jax.random.split(key, 4)

    # neuron shape = (16, 128); perturb the state so both the sub-threshold
    # and the spike/reset paths are exercised.
    N, Dl = 16, 128
    T = 4
    v0 = jax.random.uniform(k1, (N, Dl), jnp.float32, minval=-70.0, maxval=35.0)
    u0 = jax.random.uniform(k2, (N, Dl), jnp.float32, minval=-15.0, maxval=15.0)
    inp = jax.random.uniform(k3, (N, Dl), jnp.float32, minval=0.0, maxval=10.0)
    inp_seq = jax.random.uniform(k4, (T, N, Dl), jnp.float32,
                                 minval=0.0, maxval=10.0)

    # --- single forward step -------------------------------------------------
    spikes, v1, u1 = izhikevich_step(v0, u0, inp)
    jax.block_until_ready((spikes, v1, u1))

    s_r, v_r, u_r, border = izhikevich_ref(v0, u0, inp)
    ok = bool(jnp.all((spikes == s_r) | border))
    ok &= bool(jnp.all(jnp.isclose(v1, v_r, atol=2e-2, rtol=1e-4) | border))
    ok &= bool(jnp.all(jnp.isclose(u1, u_r, atol=2e-2, rtol=1e-4) | border))
    assert ok, "single-step kernel mismatch vs reference"

    # --- fused multi-step ----------------------------------------------------
    spk_seq, vT, uT = izhikevich_multi_step(v0, u0, inp_seq)
    jax.block_until_ready((spk_seq, vT, uT))

    v_c, u_c = v0, u0
    taint = jnp.zeros((N, Dl), dtype=bool)
    ok = True
    for t in range(T):
        s_r, v_c, u_c, border = izhikevich_ref(v_c, u_c, inp_seq[t])
        taint = taint | border
        ok &= bool(jnp.all((spk_seq[t] == s_r) | taint))
    ok &= bool(jnp.all(jnp.isclose(vT, v_c, atol=2e-2, rtol=1e-4) | taint))
    ok &= bool(jnp.all(jnp.isclose(uT, u_c, atol=2e-2, rtol=1e-4) | taint))
    assert ok, "multi-step kernel mismatch vs reference"

    print("KERNEL_OK")
</pallas_src>

<mosaic_0001>
module attributes {stable_mosaic.version = 11 : i64} {
  func.func @_izh_step_kernel(%arg0: i32, %arg1: memref<2x1024xf32, #tpu.memory_space<vmem>>, %arg2: memref<2x1024xf32, #tpu.memory_space<vmem>>, %arg3: memref<2x1024xf32, #tpu.memory_space<vmem>>, %arg4: memref<2x1024xf32, #tpu.memory_space<vmem>>, %arg5: memref<2x1024xf32, #tpu.memory_space<vmem>>, %arg6: memref<2x1024xf32, #tpu.memory_space<vmem>>) attributes {dimension_semantics = [#tpu.dimension_semantics<parallel>], iteration_bounds = array<i64: 1>, scalar_prefetch = 0 : i64, scratch_operands = 0 : i64, tpu.core_type = #tpu.core_type<tc>, window_params = [{transform_indices = @transform_0, window_bounds = array<i64: 2, 1024>}, {transform_indices = @transform_1, window_bounds = array<i64: 2, 1024>}, {transform_indices = @transform_2, window_bounds = array<i64: 2, 1024>}, {transform_indices = @transform_3, window_bounds = array<i64: 2, 1024>}, {transform_indices = @transform_4, window_bounds = array<i64: 2, 1024>}, {transform_indices = @transform_5, window_bounds = array<i64: 2, 1024>}]} {
    %c0 = arith.constant 0 : index
    %c0_0 = arith.constant 0 : index
    %0 = vector.load %arg1[%c0, %c0_0] : memref<2x1024xf32, #tpu.memory_space<vmem>>, vector<2x1024xf32>
    %c0_1 = arith.constant 0 : index
    %c0_2 = arith.constant 0 : index
    %1 = vector.load %arg2[%c0_1, %c0_2] : memref<2x1024xf32, #tpu.memory_space<vmem>>, vector<2x1024xf32>
    %c0_3 = arith.constant 0 : index
    %c0_4 = arith.constant 0 : index
    %2 = vector.load %arg3[%c0_3, %c0_4] : memref<2x1024xf32, #tpu.memory_space<vmem>>, vector<2x1024xf32>
    %3 = arith.mulf %0, %0 : vector<2x1024xf32>
    %cst = arith.constant 4.000000e-02 : f32
    %4 = vector.broadcast %cst : f32 to vector<2x1024xf32>
    %5 = arith.mulf %4, %3 : vector<2x1024xf32>
    %cst_5 = arith.constant 5.000000e+00 : f32
    %6 = vector.broadcast %cst_5 : f32 to vector<2x1024xf32>
    %7 = arith.mulf %6, %0 : vector<2x1024xf32>
    %8 = arith.addf %5, %7 : vector<2x1024xf32>
    %cst_6 = arith.constant 1.400000e+02 : f32
    %9 = vector.broadcast %cst_6 : f32 to vector<2x1024xf32>
    %10 = arith.addf %8, %9 : vector<2x1024xf32>
    %11 = arith.subf %10, %1 : vector<2x1024xf32>
    %12 = arith.addf %11, %2 : vector<2x1024xf32>
    %cst_7 = arith.constant 2.000000e-01 : f32
    %13 = vector.broadcast %cst_7 : f32 to vector<2x1024xf32>
    %14 = arith.mulf %13, %0 : vector<2x1024xf32>
    %15 = arith.subf %14, %1 : vector<2x1024xf32>
    %cst_8 = arith.constant 2.000000e-02 : f32
    %16 = vector.broadcast %cst_8 : f32 to vector<2x1024xf32>
    %17 = arith.mulf %16, %15 : vector<2x1024xf32>
    %cst_9 = arith.constant 1.000000e+00 : f32
    %18 = vector.broadcast %cst_9 : f32 to vector<2x1024xf32>
    %19 = arith.mulf %12, %18 : vector<2x1024xf32>
    %20 = arith.addf %0, %19 : vector<2x1024xf32>
    %cst_10 = arith.constant 1.000000e+00 : f32
    %21 = vector.broadcast %cst_10 : f32 to vector<2x1024xf32>
    %22 = arith.mulf %17, %21 : vector<2x1024xf32>
    %23 = arith.addf %1, %22 : vector<2x1024xf32>
    %cst_11 = arith.constant 3.000000e+01 : f32
    %24 = vector.broadcast %cst_11 : f32 to vector<2x1024xf32>
    %25 = arith.cmpf oge, %20, %24 : vector<2x1024xf32>
    %cst_12 = arith.constant -6.500000e+01 : f32
    %26 = vector.broadcast %cst_12 : f32 to vector<2x1024xf32>
    %27 = arith.select %25, %26, %20 : vector<2x1024xi1>, vector<2x1024xf32>
    %cst_13 = arith.constant 8.000000e+00 : f32
    %28 = vector.broadcast %cst_13 : f32 to vector<2x1024xf32>
    %29 = arith.addf %23, %28 : vector<2x1024xf32>
    %30 = arith.select %25, %29, %23 : vector<2x1024xi1>, vector<2x1024xf32>
    %31 = arith.extui %25 : vector<2x1024xi1> to vector<2x1024xi32>
    %32 = arith.sitofp %31 : vector<2x1024xi32> to vector<2x1024xf32>
    %c0_14 = arith.constant 0 : index
    %c0_15 = arith.constant 0 : index
    %33 = vector.load %arg4[%c0_14, %c0_15] : memref<2x1024xf32, #tpu.memory_space<vmem>>, vector<2x1024xf32>
    tpu.vector_store %arg4[%c0_14, %c0_15], %32 {strides = array<i32>} : memref<2x1024xf32, #tpu.memory_space<vmem>>, vector<2x1024xf32>,
    %c0_16 = arith.constant 0 : index
    %c0_17 = arith.constant 0 : index
    %34 = vector.load %arg5[%c0_16, %c0_17] : memref<2x1024xf32, #tpu.memory_space<vmem>>, vector<2x1024xf32>
    tpu.vector_store %arg5[%c0_16, %c0_17], %27 {strides = array<i32>} : memref<2x1024xf32, #tpu.memory_space<vmem>>, vector<2x1024xf32>,
    %c0_18 = arith.constant 0 : index
    %c0_19 = arith.constant 0 : index
    %35 = vector.load %arg6[%c0_18, %c0_19] : memref<2x1024xf32, #tpu.memory_space<vmem>>, vector<2x1024xf32>
    tpu.vector_store %arg6[%c0_18, %c0_19], %30 {strides = array<i32>} : memref<2x1024xf32, #tpu.memory_space<vmem>>, vector<2x1024xf32>,
    return
  }
  func.func @transform_0(%arg0: i32) -> (i32, i32) {
    %c0_i32 = arith.constant 0 : i32
    %c0_i32_0 = arith.constant 0 : i32
    return %arg0, %c0_i32 : i32, i32
  }
  func.func @transform_1(%arg0: i32) -> (i32, i32) {
    %c0_i32 = arith.constant 0 : i32
    %c0_i32_0 = arith.constant 0 : i32
    return %arg0, %c0_i32 : i32, i32
  }
  func.func @transform_2(%arg0: i32) -> (i32, i32) {
    %c0_i32 = arith.constant 0 : i32
    %c0_i32_0 = arith.constant 0 : i32
    return %arg0, %c0_i32 : i32, i32
  }
  func.func @transform_3(%arg0: i32) -> (i32, i32) {
    %c0_i32 = arith.constant 0 : i32
    %c0_i32_0 = arith.constant 0 : i32
    return %arg0, %c0_i32 : i32, i32
  }
  func.func @transform_4(%arg0: i32) -> (i32, i32) {
    %c0_i32 = arith.constant 0 : i32
    %c0_i32_0 = arith.constant 0 : i32
    return %arg0, %c0_i32 : i32, i32
  }
  func.func @transform_5(%arg0: i32) -> (i32, i32) {
    %c0_i32 = arith.constant 0 : i32
    %c0_i32_0 = arith.constant 0 : i32
    return %arg0, %c0_i32 : i32, i32
  }
}

</mosaic_0001>

<llo_original>
// kernel: tpu_custom_call.1
$region0: #{tpu_custom_call.1}
  #allocation0 [shape = 'u32[]', space=smem, size = 0x4, offset = 0x4, fixed_abs, tag = 'smem constant byte address 0x4 - core index']
  #allocation1 [shape = 'u32[144,128]{1,0:T(1,128)}', space=vmem, size = 0x12000, scoped, tag = 'internal scratch']
  %s0 = inlined_call_operand.hbm [shape: f32[2,1024], index: 0, kind: input, shape index: {}, may-alias: {0,4}]
  %s1 = inlined_call_operand.hbm [shape: f32[2,1024], index: 1, kind: input, shape index: {}, may-alias: {1,5}]
  %s2 = inlined_call_operand.vmem [shape: f32[2,1024], index: 2, kind: input, shape index: {}]
  %s3 = inlined_call_operand.hbm [shape: f32[2,1024], index: 3, kind: output, shape index: {0}]
  %s4 = inlined_call_operand.hbm [shape: f32[2,1024], index: 4, kind: output, shape index: {1}, may-alias: {0,4}]
  %s5 = inlined_call_operand.hbm [shape: f32[2,1024], index: 5, kind: output, shape index: {2}, may-alias: {1,5}]
  %6 = xla_tuple %s3, %s4, %s5
  %s7 = sld [smem:[#allocation0]]
  $region46: #{tpu_custom_call.1} parent=0
    _
  %s9 = ssub.s32 1, %s7
  %s10 = scalar_select 0, %s9, %s7
  $region1: #{tpu_custom_call.1} parent=0
    #allocation2 [shape = 'u8[8192]{0}', space=vmem, size = 0x2000, scoped, tag = 'input window, operand 0, single buffered']
    #allocation3 [shape = 's32[1]{0}', space=sflag, size = 0x4, scoped, tag = 'scoped memory for tpu_custom_call.1']
    #allocation4 [shape = 's32[1]{0}', space=sflag, size = 0x4, scoped, tag = 'scoped memory for tpu_custom_call.1']
    #allocation5 [shape = 'u8[8192]{0}', space=vmem, size = 0x2000, scoped, tag = 'input window, operand 1, single buffered']
    #allocation6 [shape = 's32[1]{0}', space=sflag, size = 0x4, scoped, tag = 'scoped memory for tpu_custom_call.1']
    #allocation7 [shape = 'u8[8192]{0}', space=vmem, size = 0x2000, scoped, tag = 'output window, operand 0, single buffered']
    #allocation8 [shape = 'u8[8192]{0}', space=vmem, size = 0x2000, scoped, tag = 'output window, operand 1, single buffered']
    #allocation9 [shape = 's32[1]{0}', space=sflag, size = 0x4, scoped, tag = 'scoped memory for tpu_custom_call.1']
    #allocation10 [shape = 'u8[8192]{0}', space=vmem, size = 0x2000, scoped, tag = 'output window, operand 2, single buffered']
    %11 = vsyncpa [#allocation3], 0
    %12 = vsyncpa [#allocation6], 0
    %13 = vsyncpa [#allocation4], 0
    %14 = vsyncpa [#allocation9], 0
    // Predicated region
    $region2: #{tpu_custom_call.1} parent=1 // pred_check
      _
    $region3: #{tpu_custom_call.1} parent=1 // pred_check_branch
      %16 = sbr.rel (0) target = $region5
    $region4: #{tpu_custom_call.1} parent=1 // pred_region
      %s18 = ssub.s32 256, 256
      %19 = vsyncadd [#allocation3], %s18
      %s21 = sshll.u32 [#allocation2], 4
      %s22 = int_to_ptr.vmem [resolvable:$true] %s21
      %24 = dma.hbm_to_vmem [thread:$0]  %s0, 256, %s22, [#allocation3]
    $region5: #{tpu_custom_call.1} parent=1 // pred_fallthru
      _
    // Predicated region
    $region6: #{tpu_custom_call.1} parent=1 // pred_check
      _
    $region7: #{tpu_custom_call.1} parent=1 // pred_check_branch
      %26 = sbr.rel (0) target = $region9
    $region8: #{tpu_custom_call.1} parent=1 // pred_region
      %s28 = ssub.s32 256, 256
      %29 = vsyncadd [#allocation6], %s28
      %s31 = sshll.u32 [#allocation5], 4
      %s32 = int_to_ptr.vmem [resolvable:$true] %s31
      %34 = dma.hbm_to_vmem [thread:$0]  %s1, 256, %s32, [#allocation6]
    $region9: #{tpu_custom_call.1} parent=1 // pred_fallthru
      _
    // Predicated region
    $region10: #{tpu_custom_call.1} parent=1 // pred_check
      _
    $region11: #{tpu_custom_call.1} parent=1 // pred_check_branch
      %36 = sbr.rel (0) target = $region13
    $region12: #{tpu_custom_call.1} parent=1 // pred_region
      _
    $region13: #{tpu_custom_call.1} parent=1 // pred_fallthru
      _
    // Predicated region
    $region14: #{tpu_custom_call.1} parent=1 // pred_check
      _
    $region15: #{tpu_custom_call.1} parent=1 // pred_check_branch
      %38 = sbr.rel (0) target = $region17
    $region16: #{tpu_custom_call.1} parent=1 // pred_region
      %39 = dma.done [#allocation3], 256
    $region17: #{tpu_custom_call.1} parent=1 // pred_fallthru
      _
    // Predicated region
    $region18: #{tpu_custom_call.1} parent=1 // pred_check
      _
    $region19: #{tpu_custom_call.1} parent=1 // pred_check_branch
      %41 = sbr.rel (0) target = $region21
    $region20: #{tpu_custom_call.1} parent=1 // pred_region
      %42 = dma.done [#allocation6], 256
    $region21: #{tpu_custom_call.1} parent=1 // pred_fallthru
      _
    %v43 = vld [vmem:[#allocation2] sm:$0xff]
    %v44 = vld [vmem:[#allocation2 + $0x8] sm:$0xff]
    %v45 = vld [vmem:[#allocation5] sm:$0xff]
    %v46 = vld [vmem:[#allocation5 + $0x8] sm:$0xff]
    %v47 = vld [vmem:[%s2] sm:$0xff]
    %v48 = vld [vmem:[%s2 + $0x8] sm:$0xff]
    %v49 = vmul.f32 %v43, %v43
    %v50 = vmul.f32 %v44, %v44
    %v51 = vmul.f32 %v49, 0.04
    %v52 = vmul.f32 %v50, 0.04
    %v53 = vmul.f32 %v43, 5.0
    %v54 = vmul.f32 %v44, 5.0
    %v55 = vadd.f32 %v51, %v53
    %v56 = vadd.f32 %v52, %v54
    %v57 = vadd.f32 %v55, 140.0
    %v58 = vadd.f32 %v56, 140.0
    %v59 = vsub.f32 %v57, %v45
    %v60 = vsub.f32 %v58, %v46
    %v61 = vadd.f32 %v59, %v47
    %v62 = vadd.f32 %v60, %v48
    %v63 = vmul.f32 %v43, 0.2
    %v64 = vmul.f32 %v44, 0.2
    %v65 = vsub.f32 %v63, %v45
    %v66 = vsub.f32 %v64, %v46
    %v67 = vmul.f32 %v65, 0.02
    %v68 = vmul.f32 %v66, 0.02
    %v69 = vadd.f32 %v43, %v61
    %v70 = vadd.f32 %v44, %v62
    %v71 = vadd.f32 %v45, %v67
    %v72 = vadd.f32 %v46, %v68
    %vm73 = vcmp.ge.f32.partialorder %v69, 30.0
    %vm74 = vcmp.ge.f32.partialorder %v70, 30.0
    %v75 = vsel %vm73, -65.0, %v69
    %v76 = vsel %vm74, -65.0, %v70
    %v77 = vadd.f32 %v71, 8.0
    %v78 = vadd.f32 %v72, 8.0
    %v79 = vsel %vm73, %v77, %v71
    %v80 = vsel %vm74, %v78, %v72
    %v81 = vsel %vm73, 1, 0
    %v82 = vsel %vm74, 1, 0
    %v83 = vcvt.s32.f32 %v81
    %v84 = vcvt.s32.f32 %v82
    %85 = vst [vmem:[#allocation7] sm:$0xff] %v83
    %86 = vst [vmem:[#allocation7 + $0x8] sm:$0xff] %v84
    %87 = vst [vmem:[#allocation8] sm:$0xff] %v75
    %88 = vst [vmem:[#allocation8 + $0x8] sm:$0xff] %v76
    %89 = vst [vmem:[#allocation10] sm:$0xff] %v79
    %90 = vst [vmem:[#allocation10 + $0x8] sm:$0xff] %v80
    // Predicated region
    $region22: #{tpu_custom_call.1} parent=1 // pred_check
      _
    $region23: #{tpu_custom_call.1} parent=1 // pred_check_branch
      %92 = sbr.rel (0) target = $region25
    $region24: #{tpu_custom_call.1} parent=1 // pred_region
      %s94 = ssub.s32 256, 256
      %95 = vsyncadd [#allocation4], %s94
      %s97 = sshll.u32 [#allocation7], 4
      %s98 = int_to_ptr.vmem [resolvable:$true] %s97
      %100 = dma.vmem_to_hbm [thread:$0]  %s98, 256, %s3, [#allocation4]
    $region25: #{tpu_custom_call.1} parent=1 // pred_fallthru
      _
    // Predicated region
    $region26: #{tpu_custom_call.1} parent=1 // pred_check
      _
    $region27: #{tpu_custom_call.1} parent=1 // pred_check_branch
      %102 = sbr.rel (0) target = $region29
    $region28: #{tpu_custom_call.1} parent=1 // pred_region
      %s104 = ssub.s32 256, 256
      %105 = vsyncadd [#allocation9], %s104
      %s107 = sshll.u32 [#allocation8], 4
      %s108 = int_to_ptr.vmem [resolvable:$true] %s107
      %110 = dma.vmem_to_hbm [thread:$0]  %s108, 256, %s4, [#allocation9]
    $region29: #{tpu_custom_call.1} parent=1 // pred_fallthru
      _
    // Predicated region
    $region30: #{tpu_custom_call.1} parent=1 // pred_check
      _
    $region31: #{tpu_custom_call.1} parent=1 // pred_check_branch
      %112 = sbr.rel (0) target = $region33
    $region32: #{tpu_custom_call.1} parent=1 // pred_region
      %s114 = ssub.s32 256, 256
      %115 = vsyncadd [#allocation9], %s114
      %s117 = sshll.u32 [#allocation10], 4
      %s118 = int_to_ptr.vmem [resolvable:$true] %s117
      %120 = dma.vmem_to_hbm [thread:$0]  %s118, 256, %s5, [#allocation9]
    $region33: #{tpu_custom_call.1} parent=1 // pred_fallthru
      _
    // Predicated region
    $region34: #{tpu_custom_call.1} parent=1 // pred_check
      _
    $region35: #{tpu_custom_call.1} parent=1 // pred_check_branch
      %122 = sbr.rel (0) target = $region37
    $region36: #{tpu_custom_call.1} parent=1 // pred_region
      %123 = dma.done [#allocation4], 256
    $region37: #{tpu_custom_call.1} parent=1 // pred_fallthru
      _
    // Predicated region
    $region38: #{tpu_custom_call.1} parent=1 // pred_check
      _
    $region39: #{tpu_custom_call.1} parent=1 // pred_check_branch
      %125 = sbr.rel (0) target = $region41
    $region40: #{tpu_custom_call.1} parent=1 // pred_region
      %126 = dma.done [#allocation9], 256
    $region41: #{tpu_custom_call.1} parent=1 // pred_fallthru
      _
    // Predicated region
    $region42: #{tpu_custom_call.1} parent=1 // pred_check
      _
    $region43: #{tpu_custom_call.1} parent=1 // pred_check_branch
      %128 = sbr.rel (0) target = $region45
    $region44: #{tpu_custom_call.1} parent=1 // pred_region
      %129 = dma.done [#allocation9], 256
    $region45: #{tpu_custom_call.1} parent=1 // pred_fallthru
      _
    %130 = vsyncpa [#allocation3], 1
    %131 = vsyncpa [#allocation6], 1
    %132 = vsyncpa [#allocation4], 1
    %133 = vsyncpa [#allocation9], 1

</llo_original>
